<compile_context>
chip_gen: v7x
topology: tpu7x:2x2x1
jax: 0.10.0
libtpu: 0.0.40
codegen_flags: <defaults>
</compile_context>

<pallas_src>
import functools
from dataclasses import dataclass

import jax
import jax.numpy as jnp
from jax.experimental import pallas as pl
from jax.experimental.pallas import tpu as pltpu


# ----------------------------- config ---------------------------------------
@dataclass
class Config:
    epoch_len: int = 3          # middle-epoch slice index = epoch_len // 2
    tc_hidden_dim: int = 128    # hidden dim of projection / predictor heads


ATT_DIM = 256                   # attention.att_dim (fixed in the PyTorch code)
FEAT_DIM = 256                  # channel dim produced by the time encoder
PATCH = 16                      # patch size of the BaseNet stand-in

# bf16 matmul inputs (f32 accumulation). Flip to jnp.float32 for bit-closer
# parity with the PyTorch f32 reference.
COMPUTE_DTYPE = jnp.bfloat16


# ----------------------------- fused Pallas kernel --------------------------
def _fused_kernel(scale, groups, T,
                  x_ref, wp_ref, watt_ref, vrow_ref,
                  pw1_ref, pb1_ref, pw2_ref, pb2_ref,
                  qw1_ref, qb1_ref, qw2_ref, qb2_ref,
                  out_ref):
    """Single step; both branches stacked along rows (groups = 2*B, each of T rows)."""
    cdt = wp_ref.dtype                                   # MXU input dtype (bf16)

    # ---- BaseNet stand-in: per-patch linear embedding -----------------------
    time = jnp.dot(x_ref[...], wp_ref[...],
                   preferred_element_type=jnp.float32)   # (2BT, 256) f32

    # ---- attention (PyTorch attention.forward) ------------------------------
    e = jnp.tanh(jnp.dot(time.astype(cdt), watt_ref[...],
                         preferred_element_type=jnp.float32))      # (2BT, 256) f32
    # V-projection as VPU multiply + lane (XLU) reduction instead of N=1 matmul;
    # the whole softmax path stays f32.
    s = jnp.sum(e * vrow_ref[...], axis=-1, keepdims=True) * scale  # (2BT, 1)
    n1 = jnp.exp(s)                        # plain exp / sum softmax, as in PyTorch

    # Per-(branch, batch) reduction over the T timesteps: sublane-group sum via
    # reshape (off the MXU).  den is carried lane-broadcast so no lane extract
    # is needed for the normalization.
    num = jnp.sum((n1 * time).reshape(groups, T, FEAT_DIM), axis=1)        # (2B, 256)
    den = jnp.sum((n1 * jnp.ones((1, FEAT_DIM), jnp.float32)
                   ).reshape(groups, T, FEAT_DIM), axis=1)                 # (2B, 256)
    feats = num * pl.reciprocal(den, approx=True)                          # (2B, 256)

    # ---- projection_head: Linear -> ReLU -> Linear ---------------------------
    h = jnp.maximum(
        jnp.dot(feats.astype(cdt), pw1_ref[...],
                preferred_element_type=jnp.float32) + pb1_ref[...], 0.0)
    proj = jnp.dot(h.astype(cdt), pw2_ref[...],
                   preferred_element_type=jnp.float32) + pb2_ref[...]

    # ---- predictor_head: Linear -> ReLU -> Linear -----------------------------
    h2 = jnp.maximum(
        jnp.dot(proj.astype(cdt), qw1_ref[...],
                preferred_element_type=jnp.float32) + qb1_ref[...], 0.0)
    pred = jnp.dot(h2.astype(cdt), qw2_ref[...],
                   preferred_element_type=jnp.float32) + qb2_ref[...]

    # Single lane-dense output slab: [proj | pred] -> (2B, 2H) = (4, 256).
    out_ref[...] = jnp.concatenate([proj, pred], axis=-1).astype(out_ref.dtype)


def fused_forward_pallas(x_rows, pc, *, B, T, H):
    """x_rows: (2*B*T, PATCH); rows 0..B*T-1 = weak, B*T..2*B*T-1 = strong."""
    scale = ATT_DIM ** (-0.5)
    groups = 2 * B
    kernel = functools.partial(_fused_kernel, scale, groups, T)
    vmem = pl.BlockSpec(memory_space=pltpu.MemorySpace.VMEM)   # whole array, VMEM resident

    return pl.pallas_call(
        kernel,
        out_shape=jax.ShapeDtypeStruct((groups, 2 * H), jnp.float32),
        in_specs=[vmem] * 12,
        out_specs=vmem,
    )(x_rows,
      pc["Wp"], pc["W_att"], pc["V_row"],
      pc["proj_W1"], pc["proj_b1"], pc["proj_W2"], pc["proj_b2"],
      pc["pred_W1"], pc["pred_b1"], pc["pred_W2"], pc["pred_b2"])


# ----------------------------- model glue -----------------------------------
def init_params(key, config: Config):
    ks = jax.random.split(key, 10)
    H = config.tc_hidden_dim
    return {
        # BaseNet stand-in: patch embedding (PATCH -> FEAT_DIM)
        "Wp": jax.random.normal(ks[0], (PATCH, FEAT_DIM), jnp.float32) * 0.1,
        # attention: W ~ randn(256, 256), V ~ randn(256, 1)
        "W_att": jax.random.normal(ks[1], (FEAT_DIM, ATT_DIM), jnp.float32),
        "V": jax.random.normal(ks[2], (ATT_DIM, 1), jnp.float32),
        # projection_head: Linear(256, H) -> ReLU -> Linear(H, H)
        "proj_W1": jax.random.normal(ks[3], (FEAT_DIM, H), jnp.float32) * 0.05,
        "proj_b1": jax.random.normal(ks[4], (1, H), jnp.float32) * 0.01,
        "proj_W2": jax.random.normal(ks[5], (H, H), jnp.float32) * 0.05,
        "proj_b2": jax.random.normal(ks[6], (1, H), jnp.float32) * 0.01,
        # predictor_head: Linear(H, H) -> ReLU -> Linear(H, H)
        "pred_W1": jax.random.normal(ks[7], (H, H), jnp.float32) * 0.05,
        "pred_b1": jax.random.normal(ks[8], (1, H), jnp.float32) * 0.01,
        "pred_W2": jax.random.normal(ks[9], (H, H), jnp.float32) * 0.05,
        "pred_b2": jnp.zeros((1, H), jnp.float32),
    }


def prepare_params(params, compute_dtype=COMPUTE_DTYPE):
    """Pre-cast MXU weights ONCE (outside the jitted forward); biases/V stay f32."""
    c = compute_dtype
    return {
        "Wp": params["Wp"].astype(c),
        "W_att": params["W_att"].astype(c),
        # V feeds the softmax path -> kept f32 and laid out as a lane row.
        "V_row": params["V"].reshape(1, ATT_DIM).astype(jnp.float32),
        "proj_W1": params["proj_W1"].astype(c), "proj_b1": params["proj_b1"],
        "proj_W2": params["proj_W2"].astype(c), "proj_b2": params["proj_b2"],
        "pred_W1": params["pred_W1"].astype(c), "pred_b1": params["pred_b1"],
        "pred_W2": params["pred_W2"].astype(c), "pred_b2": params["pred_b2"],
    }


def contrast_loss_forward(weak, strong, params_c, config: Config):
    mid = config.epoch_len // 2
    B, _, L = weak.shape
    assert L % PATCH == 0
    T = L // PATCH
    H = config.tc_hidden_dim

    # Middle-epoch slice of both branches, stacked along rows (weak first,
    # strong second) and cut into non-overlapping patches: (2*B*T, PATCH).
    x = jnp.concatenate([weak[:, mid, :], strong[:, mid, :]], axis=0)  # (2B, L)
    x = x.reshape(2 * B * T, PATCH).astype(COMPUTE_DTYPE)

    out = fused_forward_pallas(x, params_c, B=B, T=T, H=H)             # (2B, 2H)
    proj1, pred1 = out[:B, :H], out[:B, H:]
    proj2, pred2 = out[B:, :H], out[B:, H:]
    return pred1, pred2, proj1, proj2


# ----------------------------- pure-JAX reference ----------------------------
def reference_forward(weak, strong, params, config: Config,
                      compute_dtype=COMPUTE_DTYPE):
    """Compute-matched reference (bf16 matmul inputs, f32 accumulation)."""
    c = compute_dtype
    mid = config.epoch_len // 2
    B, _, L = weak.shape
    T = L // PATCH

    def branch(data):
        x = data[:, mid, :].reshape(B * T, PATCH).astype(c)
        time = jnp.dot(x, params["Wp"].astype(c),
                       preferred_element_type=jnp.float32)
        e = jnp.tanh(jnp.dot(time.astype(c), params["W_att"].astype(c),
                             preferred_element_type=jnp.float32))
        s = (e @ params["V"]) * (ATT_DIM ** (-0.5))
        n1 = jnp.exp(s).reshape(B, T, 1)
        time_b = time.reshape(B, T, FEAT_DIM)
        alpha = n1 / jnp.sum(n1, axis=1, keepdims=True)
        feats = jnp.sum(alpha * time_b, axis=1)
        h = jnp.maximum(jnp.dot(feats.astype(c), params["proj_W1"].astype(c),
                                preferred_element_type=jnp.float32)
                        + params["proj_b1"], 0.0)
        proj = jnp.dot(h.astype(c), params["proj_W2"].astype(c),
                       preferred_element_type=jnp.float32) + params["proj_b2"]
        h2 = jnp.maximum(jnp.dot(proj.astype(c), params["pred_W1"].astype(c),
                                 preferred_element_type=jnp.float32)
                         + params["pred_b1"], 0.0)
        pred = jnp.dot(h2.astype(c), params["pred_W2"].astype(c),
                       preferred_element_type=jnp.float32) + params["pred_b2"]
        return proj, pred

    proj1, pred1 = branch(weak)
    proj2, pred2 = branch(strong)
    return pred1, pred2, proj1, proj2


# ----------------------------- main -----------------------------------------
if __name__ == "__main__":
    config = Config(epoch_len=3, tc_hidden_dim=128)
    B, L = 2, 128   # L multiple of PATCH; T = L // PATCH = 8

    key = jax.random.PRNGKey(0)
    k_w, k_s, k_p = jax.random.split(key, 3)
    weak = jax.random.normal(k_w, (B, config.epoch_len, L), jnp.float32)
    strong = jax.random.normal(k_s, (B, config.epoch_len, L), jnp.float32)
    params = init_params(k_p, config)
    params_c = prepare_params(params)          # bf16 weight copy, made once

    fwd = jax.jit(functools.partial(contrast_loss_forward, config=config))
    pred1, pred2, proj1, proj2 = fwd(weak, strong, params_c)
    jax.block_until_ready((pred1, pred2, proj1, proj2))

    H = config.tc_hidden_dim
    assert pred1.shape == (B, H) and pred2.shape == (B, H)
    assert proj1.shape == (B, H) and proj2.shape == (B, H)

    # Sanity check vs. a compute-matched pure-JAX reference; loose tolerance
    # covers approx-reciprocal and accumulation-order differences.
    r_pred1, r_pred2, r_proj1, r_proj2 = reference_forward(weak, strong, params, config)
    for got, ref in ((pred1, r_pred1), (pred2, r_pred2),
                     (proj1, r_proj1), (proj2, r_proj2)):
        assert bool(jnp.all(jnp.isfinite(got)))
        assert bool(jnp.allclose(got, ref, rtol=1e-1, atol=1e-1)), \
            float(jnp.max(jnp.abs(got - ref)))
    print("KERNEL_OK")
</pallas_src>

<mosaic_0001>
module attributes {stable_mosaic.version = 11 : i64} {
  func.func @_fused_kernel(%arg0: memref<32x16xbf16, #tpu.memory_space<vmem>>, %arg1: memref<16x256xbf16, #tpu.memory_space<vmem>>, %arg2: memref<256x256xbf16, #tpu.memory_space<vmem>>, %arg3: memref<1x256xf32, #tpu.memory_space<vmem>>, %arg4: memref<256x128xbf16, #tpu.memory_space<vmem>>, %arg5: memref<1x128xf32, #tpu.memory_space<vmem>>, %arg6: memref<128x128xbf16, #tpu.memory_space<vmem>>, %arg7: memref<1x128xf32, #tpu.memory_space<vmem>>, %arg8: memref<128x128xbf16, #tpu.memory_space<vmem>>, %arg9: memref<1x128xf32, #tpu.memory_space<vmem>>, %arg10: memref<128x128xbf16, #tpu.memory_space<vmem>>, %arg11: memref<1x128xf32, #tpu.memory_space<vmem>>, %arg12: memref<4x256xf32, #tpu.memory_space<vmem>>) attributes {dimension_semantics = [], scalar_prefetch = 0 : i64, scratch_operands = 0 : i64, tpu.core_type = #tpu.core_type<tc>} {
    %c0 = arith.constant 0 : index
    %c0_0 = arith.constant 0 : index
    %0 = vector.load %arg0[%c0, %c0_0] : memref<32x16xbf16, #tpu.memory_space<vmem>>, vector<32x16xbf16>
    %c0_1 = arith.constant 0 : index
    %c0_2 = arith.constant 0 : index
    %1 = vector.load %arg1[%c0_1, %c0_2] : memref<16x256xbf16, #tpu.memory_space<vmem>>, vector<16x256xbf16>
    %cst = arith.constant dense<0.000000e+00> : vector<32x256xf32>
    %2 = tpu.matmul %0, %1, %cst {dimension_numbers = #tpu.dot_dimension_numbers<[1], [0], [0], [1], [0, 0, 1, 1], [], []>} : vector<32x16xbf16>, vector<16x256xbf16>, vector<32x256xf32> -> vector<32x256xf32>
    %3 = arith.truncf %2 : vector<32x256xf32> to vector<32x256xbf16>
    %c0_3 = arith.constant 0 : index
    %c0_4 = arith.constant 0 : index
    %4 = vector.load %arg2[%c0_3, %c0_4] : memref<256x256xbf16, #tpu.memory_space<vmem>>, vector<256x256xbf16>
    %cst_5 = arith.constant dense<0.000000e+00> : vector<32x256xf32>
    %5 = tpu.matmul %3, %4, %cst_5 {dimension_numbers = #tpu.dot_dimension_numbers<[1], [0], [0], [1], [0, 0, 1, 1], [], []>} : vector<32x256xbf16>, vector<256x256xbf16>, vector<32x256xf32> -> vector<32x256xf32>
    %6 = math.tanh %5 : vector<32x256xf32>
    %c0_6 = arith.constant 0 : index
    %c0_7 = arith.constant 0 : index
    %7 = vector.load %arg3[%c0_6, %c0_7] : memref<1x256xf32, #tpu.memory_space<vmem>>, vector<1x256xf32>
    %8 = vector.broadcast %7 : vector<1x256xf32> to vector<32x256xf32>
    %9 = arith.mulf %6, %8 : vector<32x256xf32>
    %cst_8 = arith.constant dense<0.000000e+00> : vector<32xf32>
    %10 = vector.multi_reduction <add>, %9, %cst_8 [1] : vector<32x256xf32> to vector<32xf32>
    %11 = vector.shape_cast %10 : vector<32xf32> to vector<32x1xf32>
    %cst_9 = arith.constant 6.250000e-02 : f32
    %12 = vector.broadcast %cst_9 : f32 to vector<32x1xf32>
    %13 = arith.mulf %11, %12 : vector<32x1xf32>
    %14 = math.exp %13 : vector<32x1xf32>
    %15 = vector.broadcast %14 : vector<32x1xf32> to vector<32x256xf32>
    %16 = arith.mulf %15, %2 : vector<32x256xf32>
    %17 = vector.shape_cast %16 : vector<32x256xf32> to vector<4x8x256xf32>
    %cst_10 = arith.constant dense<0.000000e+00> : vector<4x256xf32>
    %18 = vector.multi_reduction <add>, %17, %cst_10 [1] : vector<4x8x256xf32> to vector<4x256xf32>
    %cst_11 = arith.constant 1.000000e+00 : f32
    %19 = vector.broadcast %cst_11 : f32 to vector<1x256xf32>
    %20 = vector.broadcast %14 : vector<32x1xf32> to vector<32x256xf32>
    %21 = vector.broadcast %19 : vector<1x256xf32> to vector<32x256xf32>
    %22 = arith.mulf %20, %21 : vector<32x256xf32>
    %23 = vector.shape_cast %22 : vector<32x256xf32> to vector<4x8x256xf32>
    %cst_12 = arith.constant dense<0.000000e+00> : vector<4x256xf32>
    %24 = vector.multi_reduction <add>, %23, %cst_12 [1] : vector<4x8x256xf32> to vector<4x256xf32>
    %25 = tpu.reciprocal %24 {approx = true} : vector<4x256xf32> -> vector<4x256xf32>
    %26 = arith.mulf %18, %25 : vector<4x256xf32>
    %27 = arith.truncf %26 : vector<4x256xf32> to vector<4x256xbf16>
    %c0_13 = arith.constant 0 : index
    %c0_14 = arith.constant 0 : index
    %28 = vector.load %arg4[%c0_13, %c0_14] : memref<256x128xbf16, #tpu.memory_space<vmem>>, vector<256x128xbf16>
    %cst_15 = arith.constant dense<0.000000e+00> : vector<4x128xf32>
    %29 = tpu.matmul %27, %28, %cst_15 {dimension_numbers = #tpu.dot_dimension_numbers<[1], [0], [0], [1], [0, 0, 1, 1], [], []>} : vector<4x256xbf16>, vector<256x128xbf16>, vector<4x128xf32> -> vector<4x128xf32>
    %c0_16 = arith.constant 0 : index
    %c0_17 = arith.constant 0 : index
    %30 = vector.load %arg5[%c0_16, %c0_17] : memref<1x128xf32, #tpu.memory_space<vmem>>, vector<1x128xf32>
    %31 = vector.broadcast %30 : vector<1x128xf32> to vector<4x128xf32>
    %32 = arith.addf %29, %31 : vector<4x128xf32>
    %cst_18 = arith.constant 0.000000e+00 : f32
    %33 = vector.broadcast %cst_18 : f32 to vector<4x128xf32>
    %34 = arith.maximumf %32, %33 : vector<4x128xf32>
    %35 = arith.truncf %34 : vector<4x128xf32> to vector<4x128xbf16>
    %c0_19 = arith.constant 0 : index
    %c0_20 = arith.constant 0 : index
    %36 = vector.load %arg6[%c0_19, %c0_20] : memref<128x128xbf16, #tpu.memory_space<vmem>>, vector<128x128xbf16>
    %cst_21 = arith.constant dense<0.000000e+00> : vector<4x128xf32>
    %37 = tpu.matmul %35, %36, %cst_21 {dimension_numbers = #tpu.dot_dimension_numbers<[1], [0], [0], [1], [0, 0, 1, 1], [], []>} : vector<4x128xbf16>, vector<128x128xbf16>, vector<4x128xf32> -> vector<4x128xf32>
    %c0_22 = arith.constant 0 : index
    %c0_23 = arith.constant 0 : index
    %38 = vector.load %arg7[%c0_22, %c0_23] : memref<1x128xf32, #tpu.memory_space<vmem>>, vector<1x128xf32>
    %39 = vector.broadcast %38 : vector<1x128xf32> to vector<4x128xf32>
    %40 = arith.addf %37, %39 : vector<4x128xf32>
    %41 = arith.truncf %40 : vector<4x128xf32> to vector<4x128xbf16>
    %c0_24 = arith.constant 0 : index
    %c0_25 = arith.constant 0 : index
    %42 = vector.load %arg8[%c0_24, %c0_25] : memref<128x128xbf16, #tpu.memory_space<vmem>>, vector<128x128xbf16>
    %cst_26 = arith.constant dense<0.000000e+00> : vector<4x128xf32>
    %43 = tpu.matmul %41, %42, %cst_26 {dimension_numbers = #tpu.dot_dimension_numbers<[1], [0], [0], [1], [0, 0, 1, 1], [], []>} : vector<4x128xbf16>, vector<128x128xbf16>, vector<4x128xf32> -> vector<4x128xf32>
    %c0_27 = arith.constant 0 : index
    %c0_28 = arith.constant 0 : index
    %44 = vector.load %arg9[%c0_27, %c0_28] : memref<1x128xf32, #tpu.memory_space<vmem>>, vector<1x128xf32>
    %45 = vector.broadcast %44 : vector<1x128xf32> to vector<4x128xf32>
    %46 = arith.addf %43, %45 : vector<4x128xf32>
    %cst_29 = arith.constant 0.000000e+00 : f32
    %47 = vector.broadcast %cst_29 : f32 to vector<4x128xf32>
    %48 = arith.maximumf %46, %47 : vector<4x128xf32>
    %49 = arith.truncf %48 : vector<4x128xf32> to vector<4x128xbf16>
    %c0_30 = arith.constant 0 : index
    %c0_31 = arith.constant 0 : index
    %50 = vector.load %arg10[%c0_30, %c0_31] : memref<128x128xbf16, #tpu.memory_space<vmem>>, vector<128x128xbf16>
    %cst_32 = arith.constant dense<0.000000e+00> : vector<4x128xf32>
    %51 = tpu.matmul %49, %50, %cst_32 {dimension_numbers = #tpu.dot_dimension_numbers<[1], [0], [0], [1], [0, 0, 1, 1], [], []>} : vector<4x128xbf16>, vector<128x128xbf16>, vector<4x128xf32> -> vector<4x128xf32>
    %c0_33 = arith.constant 0 : index
    %c0_34 = arith.constant 0 : index
    %52 = vector.load %arg11[%c0_33, %c0_34] : memref<1x128xf32, #tpu.memory_space<vmem>>, vector<1x128xf32>
    %53 = vector.broadcast %52 : vector<1x128xf32> to vector<4x128xf32>
    %54 = arith.addf %51, %53 : vector<4x128xf32>
    %55 = tpu.concatenate %40, %54 in 1 : vector<4x128xf32>, vector<4x128xf32> -> vector<4x256xf32>
    %c0_35 = arith.constant 0 : index
    %c0_36 = arith.constant 0 : index
    %56 = vector.load %arg12[%c0_35, %c0_36] : memref<4x256xf32, #tpu.memory_space<vmem>>, vector<4x256xf32>
    tpu.vector_store %arg12[%c0_35, %c0_36], %55 {strides = array<i32>} : memref<4x256xf32, #tpu.memory_space<vmem>>, vector<4x256xf32>,
    return
  }
}

</mosaic_0001>

<llo_original>
// kernel: contrast_loss_forward.1
$region0: #{contrast_loss_forward.1}
  #allocation0 [shape = 'u32[]', space=smem, size = 0x4, offset = 0x4, fixed_abs, tag = 'smem constant byte address 0x4 - core index']
  #allocation1 [shape = 'u32[144,128]{1,0:T(1,128)}', space=vmem, size = 0x12000, scoped, tag = 'internal scratch']
  %s0 = inlined_call_operand.vmem [shape: bf16[32,16], index: 0, kind: input, shape index: {}]
  %s1 = inlined_call_operand.hbm [shape: bf16[16,256], index: 1, kind: input, shape index: {}]
  %s2 = inlined_call_operand.hbm [shape: bf16[256,256], index: 2, kind: input, shape index: {}]
  %s3 = inlined_call_operand.vmem [shape: f32[1,256], index: 3, kind: input, shape index: {}]
  %s4 = inlined_call_operand.hbm [shape: bf16[256,128], index: 4, kind: input, shape index: {}]
  %s5 = inlined_call_operand.vmem [shape: f32[1,128], index: 5, kind: input, shape index: {}]
  %s6 = inlined_call_operand.vmem [shape: bf16[128,128], index: 6, kind: input, shape index: {}]
  %s7 = inlined_call_operand.vmem [shape: f32[1,128], index: 7, kind: input, shape index: {}]
  %s8 = inlined_call_operand.hbm [shape: bf16[128,128], index: 8, kind: input, shape index: {}]
  %s9 = inlined_call_operand.vmem [shape: f32[1,128], index: 9, kind: input, shape index: {}]
  %s10 = inlined_call_operand.hbm [shape: bf16[128,128], index: 10, kind: input, shape index: {}]
  %s11 = inlined_call_operand.vmem [shape: f32[1,128], index: 11, kind: input, shape index: {}]
  %s12 = inlined_call_operand.vmem [shape: f32[4,256], index: 12, kind: output, shape index: {}]
  %s13 = sld [smem:[#allocation0]]
  $region78: #{contrast_loss_forward.1} parent=0
    _
  %s15 = ssub.s32 1, %s13
  %s16 = scalar_select 0, %s15, %s13
  $region1: #{contrast_loss_forward.1} parent=0
    #allocation2 [shape = 'u8[8192]{0}', space=vmem, size = 0x2000, scoped, tag = 'input window, operand 1, single buffered']
    #allocation3 [shape = 's32[1]{0}', space=sflag, size = 0x4, scoped, tag = 'scoped memory for contrast_loss_forward.1']
    #allocation4 [shape = 'u8[131072]{0}', space=vmem, size = 0x20000, scoped, tag = 'input window, operand 2, single buffered']
    #allocation5 [shape = 's32[1]{0}', space=sflag, size = 0x4, scoped, tag = 'scoped memory for contrast_loss_forward.1']
    #allocation6 [shape = 'u8[65536]{0}', space=vmem, size = 0x10000, scoped, tag = 'input window, operand 4, single buffered']
    #allocation7 [shape = 'u8[32768]{0}', space=vmem, size = 0x8000, scoped, tag = 'input window, operand 8, single buffered']
    #allocation8 [shape = 's32[1]{0}', space=sflag, size = 0x4, scoped, tag = 'scoped memory for contrast_loss_forward.1']
    #allocation9 [shape = 'u8[32768]{0}', space=vmem, size = 0x8000, scoped, tag = 'input window, operand 10, single buffered']
    %17 = vsyncpa [#allocation3], 0
    %18 = vsyncpa [#allocation5], 0
    %19 = vsyncpa [#allocation8], 0
    // Predicated region
    $region2: #{contrast_loss_forward.1} parent=1 // pred_check
      _
    $region3: #{contrast_loss_forward.1} parent=1 // pred_check_branch
      %21 = sbr.rel (0) target = $region5
    $region4: #{contrast_loss_forward.1} parent=1 // pred_region
      _
    $region5: #{contrast_loss_forward.1} parent=1 // pred_fallthru
      _
    // Predicated region
    $region6: #{contrast_loss_forward.1} parent=1 // pred_check
      _
    $region7: #{contrast_loss_forward.1} parent=1 // pred_check_branch
      %23 = sbr.rel (0) target = $region9
    $region8: #{contrast_loss_forward.1} parent=1 // pred_region
      %s25 = ssub.s32 256, 256
      %26 = vsyncadd [#allocation3], %s25
      %s27 = sshll.u32 [#allocation2], 4
      %s28 = int_to_ptr.vmem [resolvable:$true] %s27
      %33 = dma.hbm_to_vmem [thread:$0]  %s1, 256, %s28, [#allocation3], 128, 128, 8
    $region9: #{contrast_loss_forward.1} parent=1 // pred_fallthru
      _
    // Predicated region
    $region10: #{contrast_loss_forward.1} parent=1 // pred_check
      _
    $region11: #{contrast_loss_forward.1} parent=1 // pred_check_branch
      %35 = sbr.rel (0) target = $region13
    $region12: #{contrast_loss_forward.1} parent=1 // pred_region
      %s37 = ssub.s32 4096, 4096
      %38 = vsyncadd [#allocation5], %s37
      %s39 = sshll.u32 [#allocation4], 4
      %s40 = int_to_ptr.vmem [resolvable:$true] %s39
      %45 = dma.hbm_to_vmem [thread:$0]  %s2, 4096, %s40, [#allocation5], 128, 128, 8
    $region13: #{contrast_loss_forward.1} parent=1 // pred_fallthru
      _
    // Predicated region
    $region14: #{contrast_loss_forward.1} parent=1 // pred_check
      _
    $region15: #{contrast_loss_forward.1} parent=1 // pred_check_branch
      %47 = sbr.rel (0) target = $region17
    $region16: #{contrast_loss_forward.1} parent=1 // pred_region
      _
    $region17: #{contrast_loss_forward.1} parent=1 // pred_fallthru
      _
    // Predicated region
    $region18: #{contrast_loss_forward.1} parent=1 // pred_check
      _
    $region19: #{contrast_loss_forward.1} parent=1 // pred_check_branch
      %49 = sbr.rel (0) target = $region21
    $region20: #{contrast_loss_forward.1} parent=1 // pred_region
      %s51 = ssub.s32 2048, 2048
      %52 = vsyncadd [#allocation5], %s51
      %s53 = sshll.u32 [#allocation6], 4
      %s54 = int_to_ptr.vmem [resolvable:$true] %s53
      %59 = dma.hbm_to_vmem [thread:$0]  %s4, 2048, %s54, [#allocation5], 64, 64, 4
    $region21: #{contrast_loss_forward.1} parent=1 // pred_fallthru
      _
    // Predicated region
    $region22: #{contrast_loss_forward.1} parent=1 // pred_check
      _
    $region23: #{contrast_loss_forward.1} parent=1 // pred_check_branch
      %61 = sbr.rel (0) target = $region25
    $region24: #{contrast_loss_forward.1} parent=1 // pred_region
      _
    $region25: #{contrast_loss_forward.1} parent=1 // pred_fallthru
      _
    // Predicated region
    $region26: #{contrast_loss_forward.1} parent=1 // pred_check
      _
    $region27: #{contrast_loss_forward.1} parent=1 // pred_check_branch
      %63 = sbr.rel (0) target = $region29
    $region28: #{contrast_loss_forward.1} parent=1 // pred_region
      _
    $region29: #{contrast_loss_forward.1} parent=1 // pred_fallthru
      _
    // Predicated region
    $region30: #{contrast_loss_forward.1} parent=1 // pred_check
      _
    $region31: #{contrast_loss_forward.1} parent=1 // pred_check_branch
      %65 = sbr.rel (0) target = $region33
    $region32: #{contrast_loss_forward.1} parent=1 // pred_region
      _
    $region33: #{contrast_loss_forward.1} parent=1 // pred_fallthru
      _
    // Predicated region
    $region34: #{contrast_loss_forward.1} parent=1 // pred_check
      _
    $region35: #{contrast_loss_forward.1} parent=1 // pred_check_branch
      %67 = sbr.rel (0) target = $region37
    $region36: #{contrast_loss_forward.1} parent=1 // pred_region
      %s69 = ssub.s32 1024, 1024
      %70 = vsyncadd [#allocation8], %s69
      %s71 = sshll.u32 [#allocation7], 4
      %s72 = int_to_ptr.vmem [resolvable:$true] %s71
      %77 = dma.hbm_to_vmem [thread:$0]  %s8, 1024, %s72, [#allocation8], 64, 64, 4
    $region37: #{contrast_loss_forward.1} parent=1 // pred_fallthru
      _
    // Predicated region
    $region38: #{contrast_loss_forward.1} parent=1 // pred_check
      _
    $region39: #{contrast_loss_forward.1} parent=1 // pred_check_branch
      %79 = sbr.rel (0) target = $region41
    $region40: #{contrast_loss_forward.1} parent=1 // pred_region
      _
    $region41: #{contrast_loss_forward.1} parent=1 // pred_fallthru
      _
    // Predicated region
    $region42: #{contrast_loss_forward.1} parent=1 // pred_check
      _
    $region43: #{contrast_loss_forward.1} parent=1 // pred_check_branch
      %81 = sbr.rel (0) target = $region45
    $region44: #{contrast_loss_forward.1} parent=1 // pred_region
      %s83 = ssub.s32 1024, 1024
      %84 = vsyncadd [#allocation8], %s83
      %s85 = sshll.u32 [#allocation9], 4
      %s86 = int_to_ptr.vmem [resolvable:$true] %s85
      %91 = dma.hbm_to_vmem [thread:$0]  %s10, 1024, %s86, [#allocation8], 64, 64, 4
    $region45: #{contrast_loss_forward.1} parent=1 // pred_fallthru
      _
    // Predicated region
    $region46: #{contrast_loss_forward.1} parent=1 // pred_check
      _
    $region47: #{contrast_loss_forward.1} parent=1 // pred_check_branch
      %93 = sbr.rel (0) target = $region49
    $region48: #{contrast_loss_forward.1} parent=1 // pred_region
      _
    $region49: #{contrast_loss_forward.1} parent=1 // pred_fallthru
      _
    // Predicated region
    $region50: #{contrast_loss_forward.1} parent=1 // pred_check
      _
    $region51: #{contrast_loss_forward.1} parent=1 // pred_check_branch
      %95 = sbr.rel (0) target = $region53
    $region52: #{contrast_loss_forward.1} parent=1 // pred_region
      %96 = dma.done [#allocation3], 256
    $region53: #{contrast_loss_forward.1} parent=1 // pred_fallthru
      _
    // Predicated region
    $region54: #{contrast_loss_forward.1} parent=1 // pred_check
      _
    $region55: #{contrast_loss_forward.1} parent=1 // pred_check_branch
      %98 = sbr.rel (0) target = $region57
    $region56: #{contrast_loss_forward.1} parent=1 // pred_region
      %99 = dma.done [#allocation5], 4096
    $region57: #{contrast_loss_forward.1} parent=1 // pred_fallthru
      _
    // Predicated region
    $region58: #{contrast_loss_forward.1} parent=1 // pred_check
      _
    $region59: #{contrast_loss_forward.1} parent=1 // pred_check_branch
      %101 = sbr.rel (0) target = $region61
    $region60: #{contrast_loss_forward.1} parent=1 // pred_region
      %102 = dma.done [#allocation5], 2048
    $region61: #{contrast_loss_forward.1} parent=1 // pred_fallthru
      _
    // Predicated region
    $region62: #{contrast_loss_forward.1} parent=1 // pred_check
      _
    $region63: #{contrast_loss_forward.1} parent=1 // pred_check_branch
      %104 = sbr.rel (0) target = $region65
    $region64: #{contrast_loss_forward.1} parent=1 // pred_region
      %105 = dma.done [#allocation8], 1024
    $region65: #{contrast_loss_forward.1} parent=1 // pred_fallthru
      _
    // Predicated region
    $region66: #{contrast_loss_forward.1} parent=1 // pred_check
      _
    $region67: #{contrast_loss_forward.1} parent=1 // pred_check_branch
      %107 = sbr.rel (0) target = $region69
    $region68: #{contrast_loss_forward.1} parent=1 // pred_region
      %108 = dma.done [#allocation8], 1024
    $region69: #{contrast_loss_forward.1} parent=1 // pred_fallthru
      _
    %v110 = vld [vmem:[%s0] sm:$0xf]
    %v111 = vld [vmem:[%s0 + $0x4] sm:$0xf]
    %v112 = vld [vmem:[%s0 + $0x8] sm:$0xf]
    %v113 = vld [vmem:[%s0 + $0xc] sm:$0xf]
    %v114 = vld [vmem:[#allocation2] sm:$0xff]
    %v115 = vld [vmem:[#allocation2 + $0x8] sm:$0xff]
    %v120 = vunpack.c.l.b16 %v110
    %v121 = vunpack.c.l.b16 %v111
    %v122 = vunpack.c.l.b16 %v112
    %v123 = vunpack.c.l.b16 %v113
    %v124 = vpack.c.b16 %v121, %v120
    %v125 = vpack.c.b16 %v123, %v122
    %v128 = vunpack.c.l.b16 %v114
    %v129 = vunpack.c.h.b16 %v114
    %v130 = vunpack.c.l.b16 %v115
    %v131 = vunpack.c.h.b16 %v115
    %v132 = vpack.c.b16 %v130, %v128
    %v133 = vpack.c.b16 %v131, %v129
    %vm136 = vcmask 130048
    %v138 = vsel %vm136, %v124, 0
    %v141 = vsel %vm136, %v125, 0
    %143 = vmatprep.subr.bf16.mxu0 %v133
    %144 = vmatpush1.bf16.msra.mxu0 %v132
    %145 = vmatprep.subr.bf16.mxu0 0
    %146 = vmatpush1.bf16.msra.mxu0 0
    %147 = vmatprep.subr.bf16.mxu0 0
    %148 = vmatpush1.bf16.msra.mxu0 0
    %149 = vmatprep.subr.bf16.mxu0 0
    %150 = vmatpush1.bf16.msra.mxu0 0
    %151 = vmatprep.subr.bf16.mxu0 0
    %152 = vmatpush1.bf16.msra.mxu0 0
    %153 = vmatprep.subr.bf16.mxu0 0
    %154 = vmatpush1.bf16.msra.mxu0 0
    %155 = vmatprep.subr.bf16.mxu0 0
    %156 = vmatpush1.bf16.msra.mxu0 0
    %157 = vmatprep.subr.bf16.mxu0 0
    %158 = vmatpush1.bf16.msra.mxu0 0
    %159 = vmatprep.subr.bf16.mxu0 0
    %160 = vmatpush1.bf16.msra.mxu0 0
    %161 = vmatprep.subr.bf16.mxu0 0
    %162 = vmatpush1.bf16.msra.mxu0 0
    %163 = vmatprep.subr.bf16.mxu0 0
    %164 = vmatpush1.bf16.msra.mxu0 0
    %165 = vmatprep.subr.bf16.mxu0 0
    %166 = vmatpush1.bf16.msra.mxu0 0
    %167 = vmatprep.subr.bf16.mxu0 0
    %168 = vmatpush1.bf16.msra.mxu0 0
    %169 = vmatprep.subr.bf16.mxu0 0
    %170 = vmatpush1.bf16.msra.mxu0 0
    %171 = vmatprep.subr.bf16.mxu0 0
    %172 = vmatpush1.bf16.msra.mxu0 0
    %173 = vmatprep.subr.bf16.mxu0 0
    %174 = vmatpush1.bf16.msra.mxu0 0
    %175 = vmatprep.mubr.bf16.mxu0 0
    %176 = vmatmul.mubr.bf16.gmra.mrb[0].mxu0 %v138
    %v177 = vpop.f32.mrb[0].mxu0
    %v178 = vadd.f32 0.0, %v177
    %v179 = vpop.f32.mrb[0].mxu0
    %v180 = vadd.f32 0.0, %v179
    %v181 = vpop.f32.mrb[0].mxu0
    %v182 = vadd.f32 0.0, %v181
    %v183 = vpop.f32.mrb[0].mxu0
    %v184 = vadd.f32 0.0, %v183
    %185 = vmatprep.mubr.bf16.mxu0 0
    %186 = vmatmul.mubr.bf16.gmra.mrb[0].mxu0 %v141
    %v187 = vpop.f32.mrb[0].mxu0
    %v188 = vadd.f32 0.0, %v187
    %v189 = vpop.f32.mrb[0].mxu0
    %v190 = vadd.f32 0.0, %v189
    %v191 = vpop.f32.mrb[0].mxu0
    %v192 = vadd.f32 0.0, %v191
    %v193 = vpop.f32.mrb[0].mxu0
    %v194 = vadd.f32 0.0, %v193
    %195 = vdwg.mxu0
    %v196 = vpack.c.bf16 %v182, %v178
    %v197 = vpack.c.bf16 %v184, %v180
    %v198 = vpack.c.bf16 %v192, %v188
    %v199 = vpack.c.bf16 %v194, %v190
    %v200 = vld [vmem:[#allocation4] sm:$0xff]
    %v201 = vld [vmem:[#allocation4 + $0x8] sm:$0xff]
    %v202 = vld [vmem:[#allocation4 + $0x10] sm:$0xff]
    %v203 = vld [vmem:[#allocation4 + $0x18] sm:$0xff]
    %v204 = vld [vmem:[#allocation4 + $0x20] sm:$0xff]
    %v205 = vld [vmem:[#allocation4 + $0x28] sm:$0xff]
    %v206 = vld [vmem:[#allocation4 + $0x30] sm:$0xff]
    %v207 = vld [vmem:[#allocation4 + $0x38] sm:$0xff]
    %v208 = vld [vmem:[#allocation4 + $0x40] sm:$0xff]
    %v209 = vld [vmem:[#allocation4 + $0x48] sm:$0xff]
    %v210 = vld [vmem:[#allocation4 + $0x50] sm:$0xff]
    %v211 = vld [vmem:[#allocation4 + $0x58] sm:$0xff]
    %v212 = vld [vmem:[#allocation4 + $0x60] sm:$0xff]
    %v213 = vld [vmem:[#allocation4 + $0x68] sm:$0xff]
    %v214 = vld [vmem:[#allocation4 + $0x70] sm:$0xff]
    %v215 = vld [vmem:[#allocation4 + $0x78] sm:$0xff]
    %v216 = vld [vmem:[#allocation4 + $0x80] sm:$0xff]
    %v217 = vld [vmem:[#allocation4 + $0x88] sm:$0xff]
    %v218 = vld [vmem:[#allocation4 + $0x90] sm:$0xff]
    %v219 = vld [vmem:[#allocation4 + $0x98] sm:$0xff]
    %v220 = vld [vmem:[#allocation4 + $0xa0] sm:$0xff]
    %v221 = vld [vmem:[#allocation4 + $0xa8] sm:$0xff]
    %v222 = vld [vmem:[#allocation4 + $0xb0] sm:$0xff]
    %v223 = vld [vmem:[#allocation4 + $0xb8] sm:$0xff]
    %v224 = vld [vmem:[#allocation4 + $0xc0] sm:$0xff]
    %v225 = vld [vmem:[#allocation4 + $0xc8] sm:$0xff]
    %v226 = vld [vmem:[#allocation4 + $0xd0] sm:$0xff]
    %v227 = vld [vmem:[#allocation4 + $0xd8] sm:$0xff]
    %v228 = vld [vmem:[#allocation4 + $0xe0] sm:$0xff]
    %v229 = vld [vmem:[#allocation4 + $0xe8] sm:$0xff]
    %v230 = vld [vmem:[#allocation4 + $0xf0] sm:$0xff]
    %v231 = vld [vmem:[#allocation4 + $0xf8] sm:$0xff]
    %v264 = vunpack.c.l.b16 %v200
    %v265 = vunpack.c.h.b16 %v200
    %v266 = vunpack.c.l.b16 %v201
    %v267 = vunpack.c.h.b16 %v201
    %v268 = vunpack.c.l.b16 %v202
    %v269 = vunpack.c.h.b16 %v202
    %v270 = vunpack.c.l.b16 %v203
    %v271 = vunpack.c.h.b16 %v203
    %v272 = vunpack.c.l.b16 %v204
    %v273 = vunpack.c.h.b16 %v204
    %v274 = vunpack.c.l.b16 %v205
    %v275 = vunpack.c.h.b16 %v205
    %v276 = vunpack.c.l.b16 %v206
    %v277 = vunpack.c.h.b16 %v206
    %v278 = vunpack.c.l.b16 %v207
    %v279 = vunpack.c.h.b16 %v207
    %v280 = vunpack.c.l.b16 %v208
    %v281 = vunpack.c.h.b16 %v208
    %v282 = vunpack.c.l.b16 %v209
    %v283 = vunpack.c.h.b16 %v209
    %v284 = vunpack.c.l.b16 %v210
    %v285 = vunpack.c.h.b16 %v210
    %v286 = vunpack.c.l.b16 %v211
    %v287 = vunpack.c.h.b16 %v211
    %v288 = vunpack.c.l.b16 %v212
    %v289 = vunpack.c.h.b16 %v212
    %v290 = vunpack.c.l.b16 %v213
    %v291 = vunpack.c.h.b16 %v213
    %v292 = vunpack.c.l.b16 %v214
    %v293 = vunpack.c.h.b16 %v214
    %v294 = vunpack.c.l.b16 %v215
    %v295 = vunpack.c.h.b16 %v215
    %v296 = vunpack.c.l.b16 %v216
    %v297 = vunpack.c.h.b16 %v216
    %v298 = vunpack.c.l.b16 %v217
    %v299 = vunpack.c.h.b16 %v217
    %v300 = vunpack.c.l.b16 %v218
    %v301 = vunpack.c.h.b16 %v218
    %v302 = vunpack.c.l.b16 %v219
    %v303 = vunpack.c.h.b16 %v219
    %v304 = vunpack.c.l.b16 %v220
    %v305 = vunpack.c.h.b16 %v220
    %v306 = vunpack.c.l.b16 %v221
    %v307 = vunpack.c.h.b16 %v221
    %v308 = vunpack.c.l.b16 %v222
    %v309 = vunpack.c.h.b16 %v222
    %v310 = vunpack.c.l.b16 %v223
    %v311 = vunpack.c.h.b16 %v223
    %v312 = vunpack.c.l.b16 %v224
    %v313 = vunpack.c.h.b16 %v224
    %v314 = vunpack.c.l.b16 %v225
    %v315 = vunpack.c.h.b16 %v225
    %v316 = vunpack.c.l.b16 %v226
    %v317 = vunpack.c.h.b16 %v226
    %v318 = vunpack.c.l.b16 %v227
    %v319 = vunpack.c.h.b16 %v227
    %v320 = vunpack.c.l.b16 %v228
    %v321 = vunpack.c.h.b16 %v228
    %v322 = vunpack.c.l.b16 %v229
    %v323 = vunpack.c.h.b16 %v229
    %v324 = vunpack.c.l.b16 %v230
    %v325 = vunpack.c.h.b16 %v230
    %v326 = vunpack.c.l.b16 %v231
    %v327 = vunpack.c.h.b16 %v231
    %v328 = vpack.c.b16 %v266, %v264
    %v329 = vpack.c.b16 %v267, %v265
    %v330 = vpack.c.b16 %v270, %v268
    %v331 = vpack.c.b16 %v271, %v269
    %v332 = vpack.c.b16 %v274, %v272
    %v333 = vpack.c.b16 %v275, %v273
    %v334 = vpack.c.b16 %v278, %v276
    %v335 = vpack.c.b16 %v279, %v277
    %v336 = vpack.c.b16 %v282, %v280
    %v337 = vpack.c.b16 %v283, %v281
    %v338 = vpack.c.b16 %v286, %v284
    %v339 = vpack.c.b16 %v287, %v285
    %v340 = vpack.c.b16 %v290, %v288
    %v341 = vpack.c.b16 %v291, %v289
    %v342 = vpack.c.b16 %v294, %v292
    %v343 = vpack.c.b16 %v295, %v293
    %v344 = vpack.c.b16 %v298, %v296
    %v345 = vpack.c.b16 %v299, %v297
    %v346 = vpack.c.b16 %v302, %v300
    %v347 = vpack.c.b16 %v303, %v301
    %v348 = vpack.c.b16 %v306, %v304
    %v349 = vpack.c.b16 %v307, %v305
    %v350 = vpack.c.b16 %v310, %v308
    %v351 = vpack.c.b16 %v311, %v309
    %v352 = vpack.c.b16 %v314, %v312
    %v353 = vpack.c.b16 %v315, %v313
    %v354 = vpack.c.b16 %v318, %v316
    %v355 = vpack.c.b16 %v319, %v317
    %v356 = vpack.c.b16 %v322, %v320
    %v357 = vpack.c.b16 %v323, %v321
    %v358 = vpack.c.b16 %v326, %v324
    %v359 = vpack.c.b16 %v327, %v325
    %392 = vmatprep.subr.bf16.mxu0 %v329
    %393 = vmatpush1.bf16.msra.mxu0 %v328
    %394 = vmatprep.subr.bf16.mxu0 %v331
    %395 = vmatpush1.bf16.msra.mxu0 %v330
    %396 = vmatprep.subr.bf16.mxu0 %v333
    %397 = vmatpush1.bf16.msra.mxu0 %v332
    %398 = vmatprep.subr.bf16.mxu0 %v335
    %399 = vmatpush1.bf16.msra.mxu0 %v334
    %400 = vmatprep.subr.bf16.mxu0 %v337
    %401 = vmatpush1.bf16.msra.mxu0 %v336
    %402 = vmatprep.subr.bf16.mxu0 %v339
    %403 = vmatpush1.bf16.msra.mxu0 %v338
    %404 = vmatprep.subr.bf16.mxu0 %v341
    %405 = vmatpush1.bf16.msra.mxu0 %v340
    %406 = vmatprep.subr.bf16.mxu0 %v343
    %407 = vmatpush1.bf16.msra.mxu0 %v342
    %408 = vmatprep.subr.bf16.mxu0 %v345
    %409 = vmatpush1.bf16.msra.mxu0 %v344
    %410 = vmatprep.subr.bf16.mxu0 %v347
    %411 = vmatpush1.bf16.msra.mxu0 %v346
    %412 = vmatprep.subr.bf16.mxu0 %v349
    %413 = vmatpush1.bf16.msra.mxu0 %v348
    %414 = vmatprep.subr.bf16.mxu0 %v351
    %415 = vmatpush1.bf16.msra.mxu0 %v350
    %416 = vmatprep.subr.bf16.mxu0 %v353
    %417 = vmatpush1.bf16.msra.mxu0 %v352
    %418 = vmatprep.subr.bf16.mxu0 %v355
    %419 = vmatpush1.bf16.msra.mxu0 %v354
    %420 = vmatprep.subr.bf16.mxu0 %v357
    %421 = vmatpush1.bf16.msra.mxu0 %v356
    %422 = vmatprep.subr.bf16.mxu0 %v359
    %423 = vmatpush1.bf16.msra.mxu0 %v358
    %424 = vmatprep.mubr.bf16.mxu0 %v197
    %425 = vmatmul.mubr.bf16.gmra.mrb[0].mxu0 %v196
    %v426 = vpop.f32.mrb[0].mxu0
    %v427 = vadd.f32 0.0, %v426
    %v428 = vpop.f32.mrb[0].mxu0
    %v429 = vadd.f32 0.0, %v428
    %v430 = vpop.f32.mrb[0].mxu0
    %v431 = vadd.f32 0.0, %v430
    %v432 = vpop.f32.mrb[0].mxu0
    %v433 = vadd.f32 0.0, %v432
    %434 = vmatprep.mubr.bf16.mxu0 %v199
    %435 = vmatmul.mubr.bf16.gmra.mrb[0].mxu0 %v198
    %v436 = vpop.f32.mrb[0].mxu0
    %v437 = vadd.f32 0.0, %v436
    %v438 = vpop.f32.mrb[0].mxu0
    %v439 = vadd.f32 0.0, %v438
    %v440 = vpop.f32.mrb[0].mxu0
    %v441 = vadd.f32 0.0, %v440
    %v442 = vpop.f32.mrb[0].mxu0
    %v443 = vadd.f32 0.0, %v442
    %444 = vdwg.mxu0
    %v445 = vtanh.pop %v427
    %v446 = vtanh.pop %v429
    %v447 = vtanh.pop %v431
    %v448 = vtanh.pop %v433
    %v449 = vtanh.pop %v437
    %v450 = vtanh.pop %v439
    %v451 = vtanh.pop %v441
    %v452 = vtanh.pop %v443
    %v453 = vld [vmem:[%s3] sm:$0x3]
    %v455 = vlaneseq
    %v456 = vshrl.u32 %v455, 7
    %v457 = vsub.s32 0, %v456
    %v458 = vrot.slane %v453, %v457
    %v459 = vlaneseq
    %v460 = vshrl.u32 %v459, 7
    %v461 = vsub.s32 1, %v460
    %v462 = vrot.slane %v453, %v461
    %v465 = vmul.f32 %v445, %v458
    %v466 = vmul.f32 %v446, %v462
    %v467 = vmul.f32 %v447, %v458
    %v468 = vmul.f32 %v448, %v462
    %v469 = vmul.f32 %v449, %v458
    %v470 = vmul.f32 %v450, %v462
    %v471 = vmul.f32 %v451, %v458
    %v472 = vmul.f32 %v452, %v462
    %v473 = vadd.f32 %v465, %v466
    %474 = vadd.xlane.f32.xlu0 %v473
    %v475 = vpop.xlane.xlu0 %474
    %v476 = vadd.f32 %v467, %v468
    %477 = vadd.xlane.f32.xlu0 %v476
    %v478 = vpop.xlane.xlu0 %477
    %v479 = vadd.f32 %v469, %v470
    %480 = vadd.xlane.f32.xlu0 %v479
    %v481 = vpop.xlane.xlu0 %480
    %v482 = vadd.f32 %v471, %v472
    %483 = vadd.xlane.f32.xlu0 %v482
    %v484 = vpop.xlane.xlu0 %483
    %v485 = vmul.f32 %v475, 0.0625
    %v486 = vmul.f32 %v478, 0.0625
    %v487 = vmul.f32 %v481, 0.0625
    %v488 = vmul.f32 %v484, 0.0625
    %v489 = vmul.f32 %v485, 1.442695
    %v490 = vpow.pop %v489
    %v491 = vmul.f32 %v486, 1.442695
    %v492 = vpow.pop %v491
    %v493 = vmul.f32 %v487, 1.442695
    %v494 = vpow.pop %v493
    %v495 = vmul.f32 %v488, 1.442695
    %v496 = vpow.pop %v495
    %v497 = vmul.f32 %v490, %v178
    %v498 = vmul.f32 %v490, %v180
    %v499 = vmul.f32 %v492, %v182
    %v500 = vmul.f32 %v492, %v184
    %v501 = vmul.f32 %v494, %v188
    %v502 = vmul.f32 %v494, %v190
    %v503 = vmul.f32 %v496, %v192
    %v504 = vmul.f32 %v496, %v194
    %v505 = vrot.slane %v497, 4
    %v506 = vadd.f32 %v497, %v505
    %v507 = vrot.slane %v506, 2
    %v508 = vadd.f32 %v506, %v507
    %v509 = vrot.slane %v508, 1
    %v510 = vadd.f32 %v508, %v509
    %v511 = vrot.slane %v498, 4
    %v512 = vadd.f32 %v498, %v511
    %v513 = vrot.slane %v512, 2
    %v514 = vadd.f32 %v512, %v513
    %v515 = vrot.slane %v514, 1
    %v516 = vadd.f32 %v514, %v515
    %v517 = vrot.slane %v499, 4
    %v518 = vadd.f32 %v499, %v517
    %v519 = vrot.slane %v518, 2
    %v520 = vadd.f32 %v518, %v519
    %v521 = vrot.slane %v520, 1
    %v522 = vadd.f32 %v520, %v521
    %v523 = vrot.slane %v500, 4
    %v524 = vadd.f32 %v500, %v523
    %v525 = vrot.slane %v524, 2
    %v526 = vadd.f32 %v524, %v525
    %v527 = vrot.slane %v526, 1
    %v528 = vadd.f32 %v526, %v527
    %v529 = vrot.slane %v501, 4
    %v530 = vadd.f32 %v501, %v529
    %v531 = vrot.slane %v530, 2
    %v532 = vadd.f32 %v530, %v531
    %v533 = vrot.slane %v532, 1
    %v534 = vadd.f32 %v532, %v533
    %v535 = vrot.slane %v502, 4
    %v536 = vadd.f32 %v502, %v535
    %v537 = vrot.slane %v536, 2
    %v538 = vadd.f32 %v536, %v537
    %v539 = vrot.slane %v538, 1
    %v540 = vadd.f32 %v538, %v539
    %v541 = vrot.slane %v503, 4
    %v542 = vadd.f32 %v503, %v541
    %v543 = vrot.slane %v542, 2
    %v544 = vadd.f32 %v542, %v543
    %v545 = vrot.slane %v544, 1
    %v546 = vadd.f32 %v544, %v545
    %v547 = vrot.slane %v504, 4
    %v548 = vadd.f32 %v504, %v547
    %v549 = vrot.slane %v548, 2
    %v550 = vadd.f32 %v548, %v549
    %v551 = vrot.slane %v550, 1
    %v552 = vadd.f32 %v550, %v551
    %v553 = vrot.slane %v490, 4
    %v554 = vadd.f32 %v490, %v553
    %v555 = vrot.slane %v554, 2
    %v556 = vadd.f32 %v554, %v555
    %v557 = vrot.slane %v556, 1
    %v558 = vadd.f32 %v556, %v557
    %v559 = vrot.slane %v492, 4
    %v560 = vadd.f32 %v492, %v559
    %v561 = vrot.slane %v560, 2
    %v562 = vadd.f32 %v560, %v561
    %v563 = vrot.slane %v562, 1
    %v564 = vadd.f32 %v562, %v563
    %v565 = vrot.slane %v494, 4
    %v566 = vadd.f32 %v494, %v565
    %v567 = vrot.slane %v566, 2
    %v568 = vadd.f32 %v566, %v567
    %v569 = vrot.slane %v568, 1
    %v570 = vadd.f32 %v568, %v569
    %v571 = vrot.slane %v496, 4
    %v572 = vadd.f32 %v496, %v571
    %v573 = vrot.slane %v572, 2
    %v574 = vadd.f32 %v572, %v573
    %v575 = vrot.slane %v574, 1
    %v576 = vadd.f32 %v574, %v575
    %v577 = vrcp.pop %v558
    %v578 = vrcp.pop %v564
    %v579 = vrcp.pop %v570
    %v580 = vrcp.pop %v576
    %v581 = vmul.f32 %v510, %v577
    %v582 = vmul.f32 %v516, %v577
    %v583 = vmul.f32 %v522, %v578
    %v584 = vmul.f32 %v528, %v578
    %v585 = vmul.f32 %v534, %v579
    %v586 = vmul.f32 %v540, %v579
    %v587 = vmul.f32 %v546, %v580
    %v588 = vmul.f32 %v552, %v580
    %v589 = vpack.c.bf16 %v581, %v581
    %v590 = vpack.c.bf16 %v582, %v582
    %v591 = vpack.c.bf16 %v583, %v583
    %v592 = vpack.c.bf16 %v584, %v584
    %v593 = vpack.c.bf16 %v585, %v585
    %v594 = vpack.c.bf16 %v586, %v586
    %v595 = vpack.c.bf16 %v587, %v587
    %v596 = vpack.c.bf16 %v588, %v588
    %v597 = vld [vmem:[#allocation6] sm:$0xf]
    %v598 = vld [vmem:[#allocation6 + $0x4] sm:$0xf]
    %v599 = vld [vmem:[#allocation6 + $0x8] sm:$0xf]
    %v600 = vld [vmem:[#allocation6 + $0xc] sm:$0xf]
    %v601 = vld [vmem:[#allocation6 + $0x10] sm:$0xf]
    %v602 = vld [vmem:[#allocation6 + $0x14] sm:$0xf]
    %v603 = vld [vmem:[#allocation6 + $0x18] sm:$0xf]
    %v604 = vld [vmem:[#allocation6 + $0x1c] sm:$0xf]
    %v605 = vld [vmem:[#allocation6 + $0x20] sm:$0xf]
    %v606 = vld [vmem:[#allocation6 + $0x24] sm:$0xf]
    %v607 = vld [vmem:[#allocation6 + $0x28] sm:$0xf]
    %v608 = vld [vmem:[#allocation6 + $0x2c] sm:$0xf]
    %v609 = vld [vmem:[#allocation6 + $0x30] sm:$0xf]
    %v610 = vld [vmem:[#allocation6 + $0x34] sm:$0xf]
    %v611 = vld [vmem:[#allocation6 + $0x38] sm:$0xf]
    %v612 = vld [vmem:[#allocation6 + $0x3c] sm:$0xf]
    %v613 = vld [vmem:[#allocation6 + $0x40] sm:$0xf]
    %v614 = vld [vmem:[#allocation6 + $0x44] sm:$0xf]
    %v615 = vld [vmem:[#allocation6 + $0x48] sm:$0xf]
    %v616 = vld [vmem:[#allocation6 + $0x4c] sm:$0xf]
    %v617 = vld [vmem:[#allocation6 + $0x50] sm:$0xf]
    %v618 = vld [vmem:[#allocation6 + $0x54] sm:$0xf]
    %v619 = vld [vmem:[#allocation6 + $0x58] sm:$0xf]
    %v620 = vld [vmem:[#allocation6 + $0x5c] sm:$0xf]
    %v621 = vld [vmem:[#allocation6 + $0x60] sm:$0xf]
    %v622 = vld [vmem:[#allocation6 + $0x64] sm:$0xf]
    %v623 = vld [vmem:[#allocation6 + $0x68] sm:$0xf]
    %v624 = vld [vmem:[#allocation6 + $0x6c] sm:$0xf]
    %v625 = vld [vmem:[#allocation6 + $0x70] sm:$0xf]
    %v626 = vld [vmem:[#allocation6 + $0x74] sm:$0xf]
    %v627 = vld [vmem:[#allocation6 + $0x78] sm:$0xf]
    %v628 = vld [vmem:[#allocation6 + $0x7c] sm:$0xf]
    %v629 = vld [vmem:[%s5] sm:$0x1]
    %v631 = vlaneseq
    %v632 = vshrl.u32 %v631, 7
    %v633 = vsub.s32 0, %v632
    %v634 = vrot.slane %v629, %v633
    %v644 = vunpack.c.l.b16 %v589
    %v645 = vunpack.c.l.b16 %v590
    %v646 = vunpack.c.l.b16 %v591
    %v647 = vunpack.c.l.b16 %v592
    %v648 = vunpack.c.l.b16 %v593
    %v649 = vunpack.c.l.b16 %v594
    %v650 = vunpack.c.l.b16 %v595
    %v651 = vunpack.c.l.b16 %v596
    %vm652 = vcmask 1041409
    %v653 = vsel %vm652, %v646, %v644
    %vm654 = vcmask 1042434
    %v655 = vsel %vm654, %v648, %v653
    %vm656 = vcmask 1043459
    %v657 = vsel %vm656, %v650, %v655
    %v658 = vsel %vm652, %v647, %v645
    %v659 = vsel %vm654, %v649, %v658
    %v660 = vsel %vm656, %v651, %v659
    %v661 = vpack.c.b16 %v657, %v657
    %v662 = vpack.c.b16 %v660, %v660
    %v697 = vunpack.c.l.b16 %v597
    %v698 = vunpack.c.l.b16 %v598
    %v699 = vunpack.c.l.b16 %v599
    %v700 = vunpack.c.l.b16 %v600
    %v701 = vunpack.c.l.b16 %v601
    %v702 = vunpack.c.l.b16 %v602
    %v703 = vunpack.c.l.b16 %v603
    %v704 = vunpack.c.l.b16 %v604
    %v705 = vunpack.c.l.b16 %v605
    %v706 = vunpack.c.l.b16 %v606
    %v707 = vunpack.c.l.b16 %v607
    %v708 = vunpack.c.l.b16 %v608
    %v709 = vunpack.c.l.b16 %v609
    %v710 = vunpack.c.l.b16 %v610
    %v711 = vunpack.c.l.b16 %v611
    %v712 = vunpack.c.l.b16 %v612
    %v713 = vunpack.c.l.b16 %v613
    %v714 = vunpack.c.l.b16 %v614
    %v715 = vunpack.c.l.b16 %v615
    %v716 = vunpack.c.l.b16 %v616
    %v717 = vunpack.c.l.b16 %v617
    %v718 = vunpack.c.l.b16 %v618
    %v719 = vunpack.c.l.b16 %v619
    %v720 = vunpack.c.l.b16 %v620
    %v721 = vunpack.c.l.b16 %v621
    %v722 = vunpack.c.l.b16 %v622
    %v723 = vunpack.c.l.b16 %v623
    %v724 = vunpack.c.l.b16 %v624
    %v725 = vunpack.c.l.b16 %v625
    %v726 = vunpack.c.l.b16 %v626
    %v727 = vunpack.c.l.b16 %v627
    %v728 = vunpack.c.l.b16 %v628
    %v729 = vpack.c.b16 %v698, %v697
    %v730 = vpack.c.b16 %v700, %v699
    %v731 = vpack.c.b16 %v702, %v701
    %v732 = vpack.c.b16 %v704, %v703
    %v733 = vpack.c.b16 %v706, %v705
    %v734 = vpack.c.b16 %v708, %v707
    %v735 = vpack.c.b16 %v710, %v709
    %v736 = vpack.c.b16 %v712, %v711
    %v737 = vpack.c.b16 %v714, %v713
    %v738 = vpack.c.b16 %v716, %v715
    %v739 = vpack.c.b16 %v718, %v717
    %v740 = vpack.c.b16 %v720, %v719
    %v741 = vpack.c.b16 %v722, %v721
    %v742 = vpack.c.b16 %v724, %v723
    %v743 = vpack.c.b16 %v726, %v725
    %v744 = vpack.c.b16 %v728, %v727
    %761 = vmatprep.subr.bf16.mxu0 0
    %762 = vmatpush1.bf16.msra.mxu0 %v729
    %763 = vmatprep.subr.bf16.mxu0 0
    %764 = vmatpush1.bf16.msra.mxu0 %v730
    %765 = vmatprep.subr.bf16.mxu0 0
    %766 = vmatpush1.bf16.msra.mxu0 %v731
    %767 = vmatprep.subr.bf16.mxu0 0
    %768 = vmatpush1.bf16.msra.mxu0 %v732
    %769 = vmatprep.subr.bf16.mxu0 0
    %770 = vmatpush1.bf16.msra.mxu0 %v733
    %771 = vmatprep.subr.bf16.mxu0 0
    %772 = vmatpush1.bf16.msra.mxu0 %v734
    %773 = vmatprep.subr.bf16.mxu0 0
    %774 = vmatpush1.bf16.msra.mxu0 %v735
    %775 = vmatprep.subr.bf16.mxu0 0
    %776 = vmatpush1.bf16.msra.mxu0 %v736
    %777 = vmatprep.subr.bf16.mxu0 0
    %778 = vmatpush1.bf16.msra.mxu0 %v737
    %779 = vmatprep.subr.bf16.mxu0 0
    %780 = vmatpush1.bf16.msra.mxu0 %v738
    %781 = vmatprep.subr.bf16.mxu0 0
    %782 = vmatpush1.bf16.msra.mxu0 %v739
    %783 = vmatprep.subr.bf16.mxu0 0
    %784 = vmatpush1.bf16.msra.mxu0 %v740
    %785 = vmatprep.subr.bf16.mxu0 0
    %786 = vmatpush1.bf16.msra.mxu0 %v741
    %787 = vmatprep.subr.bf16.mxu0 0
    %788 = vmatpush1.bf16.msra.mxu0 %v742
    %789 = vmatprep.subr.bf16.mxu0 0
    %790 = vmatpush1.bf16.msra.mxu0 %v743
    %791 = vmatprep.subr.bf16.mxu0 0
    %792 = vmatpush1.bf16.msra.mxu0 %v744
    %793 = vmatprep.mubr.bf16.mxu0 %v662
    %794 = vmatmul.mubr.bf16.gmra.mrb[0].mxu0 %v661
    %v795 = vpop.f32.mrb[0].mxu0
    %v796 = vadd.f32 %v634, %v795
    %v797 = vpop.f32.mrb[0].mxu0
    %v798 = vpop.f32.mrb[0].mxu0
    %v799 = vpop.f32.mrb[0].mxu0
    %800 = vdwg.mxu0
    %v801 = vmax.f32 %v796, 0.0
    %v802 = vpack.c.bf16 %v801, %v801
    %v803 = vld [vmem:[%s6] sm:$0xf]
    %v804 = vld [vmem:[%s6 + $0x4] sm:$0xf]
    %v805 = vld [vmem:[%s6 + $0x8] sm:$0xf]
    %v806 = vld [vmem:[%s6 + $0xc] sm:$0xf]
    %v807 = vld [vmem:[%s6 + $0x10] sm:$0xf]
    %v808 = vld [vmem:[%s6 + $0x14] sm:$0xf]
    %v809 = vld [vmem:[%s6 + $0x18] sm:$0xf]
    %v810 = vld [vmem:[%s6 + $0x1c] sm:$0xf]
    %v811 = vld [vmem:[%s6 + $0x20] sm:$0xf]
    %v812 = vld [vmem:[%s6 + $0x24] sm:$0xf]
    %v813 = vld [vmem:[%s6 + $0x28] sm:$0xf]
    %v814 = vld [vmem:[%s6 + $0x2c] sm:$0xf]
    %v815 = vld [vmem:[%s6 + $0x30] sm:$0xf]
    %v816 = vld [vmem:[%s6 + $0x34] sm:$0xf]
    %v817 = vld [vmem:[%s6 + $0x38] sm:$0xf]
    %v818 = vld [vmem:[%s6 + $0x3c] sm:$0xf]
    %v819 = vld [vmem:[%s7] sm:$0x1]
    %v821 = vlaneseq
    %v822 = vshrl.u32 %v821, 7
    %v823 = vsub.s32 0, %v822
    %v824 = vrot.slane %v819, %v823
    %v842 = vunpack.c.l.b16 %v803
    %v843 = vunpack.c.l.b16 %v804
    %v844 = vunpack.c.l.b16 %v805
    %v845 = vunpack.c.l.b16 %v806
    %v846 = vunpack.c.l.b16 %v807
    %v847 = vunpack.c.l.b16 %v808
    %v848 = vunpack.c.l.b16 %v809
    %v849 = vunpack.c.l.b16 %v810
    %v850 = vunpack.c.l.b16 %v811
    %v851 = vunpack.c.l.b16 %v812
    %v852 = vunpack.c.l.b16 %v813
    %v853 = vunpack.c.l.b16 %v814
    %v854 = vunpack.c.l.b16 %v815
    %v855 = vunpack.c.l.b16 %v816
    %v856 = vunpack.c.l.b16 %v817
    %v857 = vunpack.c.l.b16 %v818
    %v858 = vpack.c.b16 %v843, %v842
    %v859 = vpack.c.b16 %v845, %v844
    %v860 = vpack.c.b16 %v847, %v846
    %v861 = vpack.c.b16 %v849, %v848
    %v862 = vpack.c.b16 %v851, %v850
    %v863 = vpack.c.b16 %v853, %v852
    %v864 = vpack.c.b16 %v855, %v854
    %v865 = vpack.c.b16 %v857, %v856
    %874 = vmatprep.subr.bf16.mxu0 0
    %875 = vmatpush1.bf16.msra.mxu0 %v858
    %876 = vmatprep.subr.bf16.mxu0 0
    %877 = vmatpush1.bf16.msra.mxu0 %v859
    %878 = vmatprep.subr.bf16.mxu0 0
    %879 = vmatpush1.bf16.msra.mxu0 %v860
    %880 = vmatprep.subr.bf16.mxu0 0
    %881 = vmatpush1.bf16.msra.mxu0 %v861
    %882 = vmatprep.subr.bf16.mxu0 0
    %883 = vmatpush1.bf16.msra.mxu0 %v862
    %884 = vmatprep.subr.bf16.mxu0 0
    %885 = vmatpush1.bf16.msra.mxu0 %v863
    %886 = vmatprep.subr.bf16.mxu0 0
    %887 = vmatpush1.bf16.msra.mxu0 %v864
    %888 = vmatprep.subr.bf16.mxu0 0
    %889 = vmatpush1.bf16.msra.mxu0 %v865
    %890 = vmatprep.subr.bf16.mxu0 0
    %891 = vmatpush1.bf16.msra.mxu0 0
    %892 = vmatprep.subr.bf16.mxu0 0
    %893 = vmatpush1.bf16.msra.mxu0 0
    %894 = vmatprep.subr.bf16.mxu0 0
    %895 = vmatpush1.bf16.msra.mxu0 0
    %896 = vmatprep.subr.bf16.mxu0 0
    %897 = vmatpush1.bf16.msra.mxu0 0
    %898 = vmatprep.subr.bf16.mxu0 0
    %899 = vmatpush1.bf16.msra.mxu0 0
    %900 = vmatprep.subr.bf16.mxu0 0
    %901 = vmatpush1.bf16.msra.mxu0 0
    %902 = vmatprep.subr.bf16.mxu0 0
    %903 = vmatpush1.bf16.msra.mxu0 0
    %904 = vmatprep.subr.bf16.mxu0 0
    %905 = vmatpush1.bf16.msra.mxu0 0
    %906 = vmatprep.mubr.bf16.mxu0 0
    %907 = vmatmul.mubr.bf16.gmra.mrb[0].mxu0 %v802
    %v908 = vpop.f32.mrb[0].mxu0
    %v909 = vadd.f32 %v824, %v908
    %v910 = vpop.f32.mrb[0].mxu0
    %v911 = vpop.f32.mrb[0].mxu0
    %v912 = vpop.f32.mrb[0].mxu0
    %913 = vdwg.mxu0
    %v914 = vpack.c.bf16 %v909, %v909
    %v915 = vld [vmem:[#allocation7] sm:$0xf]
    %v916 = vld [vmem:[#allocation7 + $0x4] sm:$0xf]
    %v917 = vld [vmem:[#allocation7 + $0x8] sm:$0xf]
    %v918 = vld [vmem:[#allocation7 + $0xc] sm:$0xf]
    %v919 = vld [vmem:[#allocation7 + $0x10] sm:$0xf]
    %v920 = vld [vmem:[#allocation7 + $0x14] sm:$0xf]
    %v921 = vld [vmem:[#allocation7 + $0x18] sm:$0xf]
    %v922 = vld [vmem:[#allocation7 + $0x1c] sm:$0xf]
    %v923 = vld [vmem:[#allocation7 + $0x20] sm:$0xf]
    %v924 = vld [vmem:[#allocation7 + $0x24] sm:$0xf]
    %v925 = vld [vmem:[#allocation7 + $0x28] sm:$0xf]
    %v926 = vld [vmem:[#allocation7 + $0x2c] sm:$0xf]
    %v927 = vld [vmem:[#allocation7 + $0x30] sm:$0xf]
    %v928 = vld [vmem:[#allocation7 + $0x34] sm:$0xf]
    %v929 = vld [vmem:[#allocation7 + $0x38] sm:$0xf]
    %v930 = vld [vmem:[#allocation7 + $0x3c] sm:$0xf]
    %v931 = vld [vmem:[%s9] sm:$0x1]
    %v933 = vlaneseq
    %v934 = vshrl.u32 %v933, 7
    %v935 = vsub.s32 0, %v934
    %v936 = vrot.slane %v931, %v935
    %v954 = vunpack.c.l.b16 %v915
    %v955 = vunpack.c.l.b16 %v916
    %v956 = vunpack.c.l.b16 %v917
    %v957 = vunpack.c.l.b16 %v918
    %v958 = vunpack.c.l.b16 %v919
    %v959 = vunpack.c.l.b16 %v920
    %v960 = vunpack.c.l.b16 %v921
    %v961 = vunpack.c.l.b16 %v922
    %v962 = vunpack.c.l.b16 %v923
    %v963 = vunpack.c.l.b16 %v924
    %v964 = vunpack.c.l.b16 %v925
    %v965 = vunpack.c.l.b16 %v926
    %v966 = vunpack.c.l.b16 %v927
    %v967 = vunpack.c.l.b16 %v928
    %v968 = vunpack.c.l.b16 %v929
    %v969 = vunpack.c.l.b16 %v930
    %v970 = vpack.c.b16 %v955, %v954
    %v971 = vpack.c.b16 %v957, %v956
    %v972 = vpack.c.b16 %v959, %v958
    %v973 = vpack.c.b16 %v961, %v960
    %v974 = vpack.c.b16 %v963, %v962
    %v975 = vpack.c.b16 %v965, %v964
    %v976 = vpack.c.b16 %v967, %v966
    %v977 = vpack.c.b16 %v969, %v968
    %986 = vmatprep.subr.bf16.mxu0 0
    %987 = vmatpush1.bf16.msra.mxu0 %v970
    %988 = vmatprep.subr.bf16.mxu0 0
    %989 = vmatpush1.bf16.msra.mxu0 %v971
    %990 = vmatprep.subr.bf16.mxu0 0
    %991 = vmatpush1.bf16.msra.mxu0 %v972
    %992 = vmatprep.subr.bf16.mxu0 0
    %993 = vmatpush1.bf16.msra.mxu0 %v973
    %994 = vmatprep.subr.bf16.mxu0 0
    %995 = vmatpush1.bf16.msra.mxu0 %v974
    %996 = vmatprep.subr.bf16.mxu0 0
    %997 = vmatpush1.bf16.msra.mxu0 %v975
    %998 = vmatprep.subr.bf16.mxu0 0
    %999 = vmatpush1.bf16.msra.mxu0 %v976
    %1000 = vmatprep.subr.bf16.mxu0 0
    %1001 = vmatpush1.bf16.msra.mxu0 %v977
    %1002 = vmatprep.subr.bf16.mxu0 0
    %1003 = vmatpush1.bf16.msra.mxu0 0
    %1004 = vmatprep.subr.bf16.mxu0 0
    %1005 = vmatpush1.bf16.msra.mxu0 0
    %1006 = vmatprep.subr.bf16.mxu0 0
    %1007 = vmatpush1.bf16.msra.mxu0 0
    %1008 = vmatprep.subr.bf16.mxu0 0
    %1009 = vmatpush1.bf16.msra.mxu0 0
    %1010 = vmatprep.subr.bf16.mxu0 0
    %1011 = vmatpush1.bf16.msra.mxu0 0
    %1012 = vmatprep.subr.bf16.mxu0 0
    %1013 = vmatpush1.bf16.msra.mxu0 0
    %1014 = vmatprep.subr.bf16.mxu0 0
    %1015 = vmatpush1.bf16.msra.mxu0 0
    %1016 = vmatprep.subr.bf16.mxu0 0
    %1017 = vmatpush1.bf16.msra.mxu0 0
    %1018 = vmatprep.mubr.bf16.mxu0 0
    %1019 = vmatmul.mubr.bf16.gmra.mrb[0].mxu0 %v914
    %v1020 = vpop.f32.mrb[0].mxu0
    %v1021 = vadd.f32 %v936, %v1020
    %v1022 = vpop.f32.mrb[0].mxu0
    %v1023 = vpop.f32.mrb[0].mxu0
    %v1024 = vpop.f32.mrb[0].mxu0
    %1025 = vdwg.mxu0
    %v1026 = vmax.f32 %v1021, 0.0
    %v1027 = vpack.c.bf16 %v1026, %v1026
    %v1028 = vld [vmem:[#allocation9] sm:$0xf]
    %v1029 = vld [vmem:[#allocation9 + $0x4] sm:$0xf]
    %v1030 = vld [vmem:[#allocation9 + $0x8] sm:$0xf]
    %v1031 = vld [vmem:[#allocation9 + $0xc] sm:$0xf]
    %v1032 = vld [vmem:[#allocation9 + $0x10] sm:$0xf]
    %v1033 = vld [vmem:[#allocation9 + $0x14] sm:$0xf]
    %v1034 = vld [vmem:[#allocation9 + $0x18] sm:$0xf]
    %v1035 = vld [vmem:[#allocation9 + $0x1c] sm:$0xf]
    %v1036 = vld [vmem:[#allocation9 + $0x20] sm:$0xf]
    %v1037 = vld [vmem:[#allocation9 + $0x24] sm:$0xf]
    %v1038 = vld [vmem:[#allocation9 + $0x28] sm:$0xf]
    %v1039 = vld [vmem:[#allocation9 + $0x2c] sm:$0xf]
    %v1040 = vld [vmem:[#allocation9 + $0x30] sm:$0xf]
    %v1041 = vld [vmem:[#allocation9 + $0x34] sm:$0xf]
    %v1042 = vld [vmem:[#allocation9 + $0x38] sm:$0xf]
    %v1043 = vld [vmem:[#allocation9 + $0x3c] sm:$0xf]
    %v1044 = vld [vmem:[%s11] sm:$0x1]
    %v1046 = vlaneseq
    %v1047 = vshrl.u32 %v1046, 7
    %v1048 = vsub.s32 0, %v1047
    %v1049 = vrot.slane %v1044, %v1048
    %v1067 = vunpack.c.l.b16 %v1028
    %v1068 = vunpack.c.l.b16 %v1029
    %v1069 = vunpack.c.l.b16 %v1030
    %v1070 = vunpack.c.l.b16 %v1031
    %v1071 = vunpack.c.l.b16 %v1032
    %v1072 = vunpack.c.l.b16 %v1033
    %v1073 = vunpack.c.l.b16 %v1034
    %v1074 = vunpack.c.l.b16 %v1035
    %v1075 = vunpack.c.l.b16 %v1036
    %v1076 = vunpack.c.l.b16 %v1037
    %v1077 = vunpack.c.l.b16 %v1038
    %v1078 = vunpack.c.l.b16 %v1039
    %v1079 = vunpack.c.l.b16 %v1040
    %v1080 = vunpack.c.l.b16 %v1041
    %v1081 = vunpack.c.l.b16 %v1042
    %v1082 = vunpack.c.l.b16 %v1043
    %v1083 = vpack.c.b16 %v1068, %v1067
    %v1084 = vpack.c.b16 %v1070, %v1069
    %v1085 = vpack.c.b16 %v1072, %v1071
    %v1086 = vpack.c.b16 %v1074, %v1073
    %v1087 = vpack.c.b16 %v1076, %v1075
    %v1088 = vpack.c.b16 %v1078, %v1077
    %v1089 = vpack.c.b16 %v1080, %v1079
    %v1090 = vpack.c.b16 %v1082, %v1081
    %1099 = vmatprep.subr.bf16.mxu0 0
    %1100 = vmatpush1.bf16.msra.mxu0 %v1083
    %1101 = vmatprep.subr.bf16.mxu0 0
    %1102 = vmatpush1.bf16.msra.mxu0 %v1084
    %1103 = vmatprep.subr.bf16.mxu0 0
    %1104 = vmatpush1.bf16.msra.mxu0 %v1085
    %1105 = vmatprep.subr.bf16.mxu0 0
    %1106 = vmatpush1.bf16.msra.mxu0 %v1086
    %1107 = vmatprep.subr.bf16.mxu0 0
    %1108 = vmatpush1.bf16.msra.mxu0 %v1087
    %1109 = vmatprep.subr.bf16.mxu0 0
    %1110 = vmatpush1.bf16.msra.mxu0 %v1088
    %1111 = vmatprep.subr.bf16.mxu0 0
    %1112 = vmatpush1.bf16.msra.mxu0 %v1089
    %1113 = vmatprep.subr.bf16.mxu0 0
    %1114 = vmatpush1.bf16.msra.mxu0 %v1090
    %1115 = vmatprep.subr.bf16.mxu0 0
    %1116 = vmatpush1.bf16.msra.mxu0 0
    %1117 = vmatprep.subr.bf16.mxu0 0
    %1118 = vmatpush1.bf16.msra.mxu0 0
    %1119 = vmatprep.subr.bf16.mxu0 0
    %1120 = vmatpush1.bf16.msra.mxu0 0
    %1121 = vmatprep.subr.bf16.mxu0 0
    %1122 = vmatpush1.bf16.msra.mxu0 0
    %1123 = vmatprep.subr.bf16.mxu0 0
    %1124 = vmatpush1.bf16.msra.mxu0 0
    %1125 = vmatprep.subr.bf16.mxu0 0
    %1126 = vmatpush1.bf16.msra.mxu0 0
    %1127 = vmatprep.subr.bf16.mxu0 0
    %1128 = vmatpush1.bf16.msra.mxu0 0
    %1129 = vmatprep.subr.bf16.mxu0 0
    %1130 = vmatpush1.bf16.msra.mxu0 0
    %1131 = vmatprep.mubr.bf16.mxu0 0
    %1132 = vmatmul.mubr.bf16.gmra.mrb[0].mxu0 %v1027
    %v1133 = vpop.f32.mrb[0].mxu0
    %v1134 = vadd.f32 %v1049, %v1133
    %v1135 = vpop.f32.mrb[0].mxu0
    %v1136 = vpop.f32.mrb[0].mxu0
    %v1137 = vpop.f32.mrb[0].mxu0
    %1138 = vdwg.mxu0
    %v1141 = vcombine.low %v909, %v1134
    %1143 = vst [vmem:[%s12] sm:$0xff] %v1141
    // Predicated region
    $region70: #{contrast_loss_forward.1} parent=1 // pred_check
      _
    $region71: #{contrast_loss_forward.1} parent=1 // pred_check_branch
      %1145 = sbr.rel (0) target = $region73
    $region72: #{contrast_loss_forward.1} parent=1 // pred_region
      _
    $region73: #{contrast_loss_forward.1} parent=1 // pred_fallthru
      _
    // Predicated region
    $region74: #{contrast_loss_forward.1} parent=1 // pred_check
      _
    $region75: #{contrast_loss_forward.1} parent=1 // pred_check_branch
      %1147 = sbr.rel (0) target = $region77
    $region76: #{contrast_loss_forward.1} parent=1 // pred_region
      _
    $region77: #{contrast_loss_forward.1} parent=1 // pred_fallthru
      _
    %1148 = vsyncpa [#allocation3], 1
    %1149 = vsyncpa [#allocation5], 1
    %1150 = vsyncpa [#allocation8], 1

</llo_original>
